<compile_context>
chip_gen: v6e
topology: v6e:2x2x1
jax: 0.10.0
libtpu: 0.0.40
codegen_flags: <defaults>
</compile_context>

<pallas_src>
import math

import jax
import jax.numpy as jnp
from jax.experimental import pallas as pl
from jax.experimental.pallas import tpu as pltpu


# --------------------------------------------------------------------------- #
# Pallas kernel
#   z_ref : (tb, n_pad)          per-batch-tile node features
#   w_ref : (n_pad, n_pad*d)     block-diagonal expansion of per-node W_i[0, :]
#   eb_ref: (1, n_pad*d)         per-node effective bias (Linear bias + one-hot row)
#   o_ref : (tb, n_pad*d)        tanh(z @ W_exp + eff_bias), lane-dense
# --------------------------------------------------------------------------- #
def _embed_kernel(z_ref, w_ref, eb_ref, o_ref):
    # out[b, i*d+k] = tanh(z[b, i] * W_i[0, k] + eff_bias_i[k]); the per-node
    # broadcast is realized as a tiny block-diagonal matmul on the (idle) MXU,
    # so no in-kernel reshape/repeat and the store stays lane-dense.
    acc = jnp.dot(
        z_ref[...].astype(jnp.float32),
        w_ref[...].astype(jnp.float32),
        preferred_element_type=jnp.float32,
        precision=jax.lax.Precision.HIGHEST,
    )
    y = jnp.tanh(acc + eb_ref[...].astype(jnp.float32))
    o_ref[...] = y.astype(o_ref.dtype)


def _pick_batch_tile(n_rows, row_bytes, target_block_bytes=2 << 20, min_grid_steps=4):
    """Rows per output block: ~2 MiB, 8-row aligned, and small enough to give
    >= min_grid_steps grid steps (pipelining + both v7x TensorCores) when the
    batch is big enough."""
    tb = max(8, (target_block_bytes // max(row_bytes, 1)) // 8 * 8)
    cap = max(8, ((pl.cdiv(n_rows, min_grid_steps) + 7) // 8) * 8)
    return min(tb, cap)


def embed_nodes_pallas(z_pad, w_exp, eb_flat, out_dtype=jnp.float32):
    """z_pad: (b, n_pad) f32; w_exp: (n_pad, n_pad*d); eb_flat: (1, n_pad*d)."""
    b, n_pad = z_pad.shape
    _, nd_pad = w_exp.shape
    itemsize = jnp.dtype(out_dtype).itemsize

    tb = _pick_batch_tile(b, nd_pad * itemsize)
    b_pad = pl.cdiv(b, tb) * tb
    if b_pad != b:
        z_pad = jnp.pad(z_pad, ((0, b_pad - b), (0, 0)))
    grid = (b_pad // tb,)

    out = pl.pallas_call(
        _embed_kernel,
        out_shape=jax.ShapeDtypeStruct((b_pad, nd_pad), out_dtype),
        grid_spec=pltpu.PrefetchScalarGridSpec(
            num_scalar_prefetch=0,
            grid=grid,
            in_specs=[
                pl.BlockSpec((tb, n_pad), lambda i: (i, 0)),
                pl.BlockSpec((n_pad, nd_pad), lambda i: (0, 0)),
                pl.BlockSpec((1, nd_pad), lambda i: (0, 0)),
            ],
            out_specs=pl.BlockSpec((tb, nd_pad), lambda i: (i, 0)),
        ),
        compiler_params=pltpu.CompilerParams(
            dimension_semantics=("parallel",)),
    )(z_pad, w_exp, eb_flat)
    return out[:b]


# --------------------------------------------------------------------------- #
# Module wrapper
# --------------------------------------------------------------------------- #
class GraphInputProcessorHetPallas:
    """JAX/Pallas port of GraphInputProcessorHet.

    The per-node Linear(feat_dim, decoder_dim) + Tanh is computed by one
    lane-dense Pallas kernel.  Because the het-encoded feature row is
    [z[:, i], e_i] (one-hot), x_i @ W_i == z[:, i] * W_i[0, :] + W_i[1+i, :];
    the constant row is folded into an effective bias, and the z broadcast is
    expressed as a block-diagonal matmul done inside the kernel.
    """

    def __init__(self, input_dim, decoder_dim, n_edge_types, het_encoding, key,
                 out_dtype=jnp.float32, min_pallas_rows=64):
        self.input_dim = input_dim
        self.decoder_dim = decoder_dim
        self.n_edge_types = n_edge_types
        self.het_encoding = het_encoding
        self.out_dtype = out_dtype
        self.min_pallas_rows = min_pallas_rows

        feat_dim = input_dim + 1 if het_encoding else 1
        self.feat_dim = feat_dim

        # Deterministic init mimicking nn.Linear default (uniform +-1/sqrt(fan_in)).
        kw, kb = jax.random.split(key)
        limit = 1.0 / float(feat_dim) ** 0.5
        self.W = jax.random.uniform(
            kw, (input_dim, feat_dim, decoder_dim), jnp.float32, -limit, limit)
        self.bias = jax.random.uniform(
            kb, (input_dim, decoder_dim), jnp.float32, -limit, limit)

        # Reparametrize: x_i @ W_i == z[:, i] * W_i[0, :] + (W_i[1 + i, :] if het)
        w0 = self.W[:, 0, :]                                    # (n, d)
        if het_encoding:
            idx = jnp.arange(input_dim)
            eff_bias = self.bias + self.W[idx, 1 + idx, :]      # fold one-hot row
        else:
            eff_bias = self.bias

        # Lane padding: choose n_pad so n_pad * d is a multiple of 128 -> the
        # flattened output stays lane-dense (unmasked stores) for any d.
        g = 128 // math.gcd(decoder_dim, 128)
        n_pad = ((input_dim + g - 1) // g) * g
        self.n_pad = n_pad
        self.nd_pad = n_pad * decoder_dim

        w0_pad = jnp.zeros((n_pad, decoder_dim), jnp.float32).at[:input_dim].set(w0)
        eb_pad = jnp.zeros((n_pad, decoder_dim), jnp.float32).at[:input_dim].set(eff_bias)

        # Block-diagonal expansion: w_exp[i, j*d+k] = w0[i, k] if i == j else 0,
        # so z @ w_exp realizes the per-node broadcast+scale in one MXU dot.
        eye = jnp.eye(n_pad, dtype=jnp.float32)
        self.w_exp = (eye[:, :, None] * w0_pad[None, :, :]).reshape(n_pad, self.nd_pad)
        self.eb_flat = eb_pad.reshape(1, self.nd_pad)

    def __call__(self, z, adj):
        b_size, n_nodes = z.shape
        if n_nodes != self.input_dim:
            raise ValueError("n_nodes must equal input_dim (per-node Linear layers).")
        if self.n_edge_types != n_nodes * n_nodes:
            raise ValueError("n_edge_types must equal n_nodes**2 for edge_types reshape.")
        d = self.decoder_dim
        n = n_nodes
        zf = z.astype(jnp.float32)

        # --- hot path: fused per-node Linear + tanh ---
        if b_size >= self.min_pallas_rows:
            if self.n_pad != n:
                zf = jnp.pad(zf, ((0, 0), (0, self.n_pad - n)))
            out_flat = embed_nodes_pallas(zf, self.w_exp, self.eb_flat, self.out_dtype)
            b_z = out_flat[:, : n * d].reshape(b_size * n, d)
        else:
            # Small-batch escape hatch: Pallas launch/DMA overhead would dominate;
            # XLA fuses this into a single elementwise kernel.
            out = jnp.tanh(
                jnp.dot(zf, self.w_exp[:n, : n * d],
                        precision=jax.lax.Precision.HIGHEST)
                + self.eb_flat[:, : n * d])
            b_z = out.astype(self.out_dtype).reshape(b_size * n, d)

        # --- dense_to_sparse (eager; dynamic n_edges) ---
        # TODO(synk): dense_to_sparse has a data-dependent output shape; no clean
        # static-shape Pallas equivalent, kept in eager JAX.
        # NOTE: the original module stacks a single (n, n) adjacency across the
        # batch, so computing nonzero() once and tiling with per-batch node
        # offsets matches the spec exactly.
        rr, cc = jnp.nonzero(adj)
        weights = adj[rr, cc]
        offs = (jnp.arange(b_size, dtype=rr.dtype) * n_nodes)[:, None]
        r_all = (rr[None, :] + offs).reshape(-1)
        c_all = (cc[None, :] + offs).reshape(-1)
        b_edge_index = jnp.stack([r_all, c_all], axis=0)        # (2, b*E)
        b_edge_weights = jnp.tile(weights, b_size)              # (b*E,)

        edge_types = jnp.arange(1, self.n_edge_types + 1, dtype=jnp.int32)
        edge_types = edge_types.reshape(n_nodes, n_nodes)
        b_edge_types = jnp.tile(edge_types[rr, cc], b_size)     # r % n == rr, c % n == cc

        return b_z, b_edge_index, b_edge_weights, b_edge_types


if __name__ == "__main__":
    key = jax.random.PRNGKey(0)
    k_param, k_z, k_adj, k_zs = jax.random.split(key, 4)

    n_nodes = 8            # input_dim == n_nodes per the module's forward contract
    decoder_dim = 32
    n_edge_types = n_nodes * n_nodes
    b_size = 128           # big enough to exercise the Pallas path (grid of 4 steps)

    proc = GraphInputProcessorHetPallas(
        input_dim=n_nodes,
        decoder_dim=decoder_dim,
        n_edge_types=n_edge_types,
        het_encoding=True,
        key=k_param,
    )

    z = jax.random.normal(k_z, (b_size, n_nodes), jnp.float32)
    adj_raw = jax.random.uniform(k_adj, (n_nodes, n_nodes), jnp.float32)
    adj = jnp.where(adj_raw > 0.5, adj_raw, 0.0)

    b_z, b_edge_index, b_edge_weights, b_edge_types = proc(z, adj)
    jax.block_until_ready((b_z, b_edge_index, b_edge_weights, b_edge_types))

    # --- reference check against the un-reparametrized original formulation ---
    def reference(z_in):
        bsz = z_in.shape[0]
        feats = z_in[..., None]
        eye = jnp.broadcast_to(jnp.eye(n_nodes, dtype=jnp.float32),
                               (bsz, n_nodes, n_nodes))
        feats = jnp.concatenate([feats, eye], axis=-1)          # (b, n, feat_dim)
        ref = jnp.tanh(jnp.einsum("bnf,nfd->bnd", feats, proc.W,
                                  precision=jax.lax.Precision.HIGHEST)
                       + proc.bias[None])
        return ref.reshape(bsz * n_nodes, decoder_dim)

    ref_big = reference(z)
    assert b_z.shape == (b_size * n_nodes, decoder_dim)
    assert jnp.allclose(b_z, ref_big, atol=1e-4, rtol=1e-4), "Pallas path mismatch"

    assert b_edge_index.shape[0] == 2
    assert b_edge_weights.shape[0] == b_edge_index.shape[1]
    assert b_edge_types.shape[0] == b_edge_index.shape[1]

    # --- small-batch escape hatch path (plain fused jnp) ---
    z_small = jax.random.normal(k_zs, (2, n_nodes), jnp.float32)
    b_z_s, _, _, _ = proc(z_small, adj)
    jax.block_until_ready(b_z_s)
    assert jnp.allclose(b_z_s, reference(z_small), atol=1e-4, rtol=1e-4), \
        "small-batch path mismatch"

    print("KERNEL_OK")
</pallas_src>

<mosaic_0001>
module attributes {stable_mosaic.version = 11 : i64} {
  func.func @_embed_kernel(%arg0: i32, %arg1: memref<32x8xf32, #tpu.memory_space<vmem>>, %arg2: memref<8x256xf32, #tpu.memory_space<vmem>>, %arg3: memref<1x256xf32, #tpu.memory_space<vmem>>, %arg4: memref<32x256xf32, #tpu.memory_space<vmem>>) attributes {dimension_semantics = [#tpu.dimension_semantics<parallel>], iteration_bounds = array<i64: 4>, scalar_prefetch = 0 : i64, scratch_operands = 0 : i64, tpu.core_type = #tpu.core_type<tc>, window_params = [{transform_indices = @transform_0, window_bounds = array<i64: 32, 8>}, {pipeline_mode = #tpu.pipeline_mode<synchronous>, transform_indices = @transform_1, window_bounds = array<i64: 8, 256>}, {pipeline_mode = #tpu.pipeline_mode<synchronous>, transform_indices = @transform_2, window_bounds = array<i64: 1, 256>}, {transform_indices = @transform_3, window_bounds = array<i64: 32, 256>}]} {
    %c0 = arith.constant 0 : index
    %c0_0 = arith.constant 0 : index
    %0 = vector.load %arg1[%c0, %c0_0] : memref<32x8xf32, #tpu.memory_space<vmem>>, vector<32x8xf32>
    %c0_1 = arith.constant 0 : index
    %c0_2 = arith.constant 0 : index
    %1 = vector.load %arg2[%c0_1, %c0_2] : memref<8x256xf32, #tpu.memory_space<vmem>>, vector<8x256xf32>
    %cst = arith.constant dense<0.000000e+00> : vector<32x256xf32>
    %2 = tpu.matmul %0, %1, %cst {dimension_numbers = #tpu.dot_dimension_numbers<[1], [0], [0], [1], [0, 0, 1, 1], [], []>, precision = #tpu.contract_precision<fp32>} : vector<32x8xf32>, vector<8x256xf32>, vector<32x256xf32> -> vector<32x256xf32>
    %c0_3 = arith.constant 0 : index
    %c0_4 = arith.constant 0 : index
    %3 = vector.load %arg3[%c0_3, %c0_4] : memref<1x256xf32, #tpu.memory_space<vmem>>, vector<1x256xf32>
    %4 = vector.broadcast %3 : vector<1x256xf32> to vector<32x256xf32>
    %5 = arith.addf %2, %4 : vector<32x256xf32>
    %6 = math.tanh %5 : vector<32x256xf32>
    %c0_5 = arith.constant 0 : index
    %c0_6 = arith.constant 0 : index
    %7 = vector.load %arg4[%c0_5, %c0_6] : memref<32x256xf32, #tpu.memory_space<vmem>>, vector<32x256xf32>
    tpu.vector_store %arg4[%c0_5, %c0_6], %6 {strides = array<i32>} : memref<32x256xf32, #tpu.memory_space<vmem>>, vector<32x256xf32>,
    return
  }
  func.func @transform_0(%arg0: i32) -> (i32, i32) {
    %c0_i32 = arith.constant 0 : i32
    %c0_i32_0 = arith.constant 0 : i32
    return %arg0, %c0_i32 : i32, i32
  }
  func.func @transform_1(%arg0: i32) -> (i32, i32) {
    %c0_i32 = arith.constant 0 : i32
    %c0_i32_0 = arith.constant 0 : i32
    %c0_i32_1 = arith.constant 0 : i32
    return %c0_i32, %c0_i32_0 : i32, i32
  }
  func.func @transform_2(%arg0: i32) -> (i32, i32) {
    %c0_i32 = arith.constant 0 : i32
    %c0_i32_0 = arith.constant 0 : i32
    %c0_i32_1 = arith.constant 0 : i32
    return %c0_i32, %c0_i32_0 : i32, i32
  }
  func.func @transform_3(%arg0: i32) -> (i32, i32) {
    %c0_i32 = arith.constant 0 : i32
    %c0_i32_0 = arith.constant 0 : i32
    return %arg0, %c0_i32 : i32, i32
  }
}

</mosaic_0001>

<llo_original>
// kernel: tpu_custom_call.1
$region0: #{tpu_custom_call.1}
  #allocation0 [shape = 'u32[]', space=smem, size = 0x4, offset = 0x4, fixed_abs, tag = 'smem constant byte address 0x4 - core index']
  #allocation1 [shape = 'u32[144,128]{1,0:T(1,128)}', space=vmem, size = 0x12000, scoped, tag = 'internal scratch']
  %s0 = inlined_call_operand.vmem [shape: f32[128,8], index: 0, kind: input, shape index: {}]
  %s1 = inlined_call_operand.vmem [shape: f32[8,256], index: 1, kind: input, shape index: {}]
  %s2 = inlined_call_operand.vmem [shape: f32[1,256], index: 2, kind: input, shape index: {}]
  %s3 = inlined_call_operand.hbm [shape: f32[128,256], index: 3, kind: output, shape index: {}]
  %s4 = sld [smem:[#allocation0]]
  $region45: #{tpu_custom_call.1} parent=0
    _
  %s6 = ssub.s32 1, %s4
  %s7 = scalar_select 0, %s6, %s4
  $region1: #{tpu_custom_call.1} parent=0
    #allocation2 [shape = 'u8[65536]{0}', space=vmem, size = 0x10000, scoped, tag = 'output window, operand 0']
    #allocation3 [shape = 's32[2]{0}', space=sflag, size = 0x8, scoped, tag = 'scoped memory for tpu_custom_call.1']
    %8 = vsyncpa [#allocation3], 0
    %s9 = scalar_lea.sflag [#allocation3], 1
    %10 = vsyncpa %s9, 0
    loop: start=0, step=1, limit=6
    $region2: #{tpu_custom_call.1} parent=1 // loop_pre_header
      _
    $region3: #{tpu_custom_call.1} parent=1 // loop_header
      %s12 = sphi 0, %s16
      %p13 = scmp.ge.s32.totalorder %s12, 6
      %s22 = sphi 0, %s24
      %s25 = sphi 0, %s22
      %s26 = sphi 0, %s25
      %s42 = sphi 0, %s26
      %s46 = sphi 0, %s46
      %s48 = sphi 0, %s46
      %s49 = sphi 0, %s48
      %s63 = sphi 0, %s49
      %s67 = sphi 0, %s67
      %s69 = sphi 0, %s67
      %s70 = sphi 0, %s69
      %s84 = sphi 0, %s70
      %s90 = sphi 0, %s92
      %s93 = sphi 0, %s90
      %s94 = sphi 0, %s93
      %s110 = sphi 0, %s94
    $region4: #{tpu_custom_call.1} parent=1 // loop_header_branch
      %15 = sbr.rel (%p13) target = $region8
    $region5: #{tpu_custom_call.1} parent=1 // loop_body
      %s17 = ssub.s32 %s12, 1
      %s18 = ssub.s32 %s12, 2
      %s19 = sadd.s32 %s12, 1
      %s20 = ssub.s32 %s12, %s19
      %p21 = scmp.eq.s32.totalorder %s20, 0
      %s23 = sadd.s32 %s22, 1
      %s24 = scalar_select %p21, %s22, %s23
      %p27 = pneg %p21
      %p28 = scmp.eq.s32.totalorder %s12, 3
      %p29 = por %p27, %p28
      %p30 = scmp.ne.s32.totalorder %s22, %s25
      %p31 = scmp.eq.s32.totalorder %s12, 0
      %p32 = por %p30, %p31
      %p33 = scmp.ne.s32.totalorder %s22, %s25
      %p34 = scmp.eq.s32.totalorder %s17, 3
      %p35 = por %p33, %p34
      %p36 = scmp.ne.s32.totalorder %s25, %s26
      %p37 = scmp.eq.s32.totalorder %s17, 0
      %p38 = por %p36, %p37
      %p39 = scmp.ne.s32.totalorder %s25, %s26
      %p40 = scmp.eq.s32.totalorder %s18, 3
      %p41 = por %p39, %p40
      %p43 = scmp.ne.s32.totalorder %s26, %s42
      %p44 = scmp.eq.s32.totalorder %s18, 0
      %p45 = por %p43, %p44
      %s47 = sadd.s32 %s46, 1
      %p50 = scmp.eq.s32.totalorder %s12, 3
      %p51 = scmp.ne.s32.totalorder %s46, %s48
      %p52 = scmp.eq.s32.totalorder %s12, 0
      %p53 = por %p51, %p52
      %p54 = scmp.ne.s32.totalorder %s46, %s48
      %p55 = scmp.eq.s32.totalorder %s17, 3
      %p56 = por %p54, %p55
      %p57 = scmp.ne.s32.totalorder %s48, %s49
      %p58 = scmp.eq.s32.totalorder %s17, 0
      %p59 = por %p57, %p58
      %p60 = scmp.ne.s32.totalorder %s48, %s49
      %p61 = scmp.eq.s32.totalorder %s18, 3
      %p62 = por %p60, %p61
      %p64 = scmp.ne.s32.totalorder %s49, %s63
      %p65 = scmp.eq.s32.totalorder %s18, 0
      %p66 = por %p64, %p65
      %s68 = sadd.s32 %s67, 1
      %p71 = scmp.eq.s32.totalorder %s12, 3
      %p72 = scmp.ne.s32.totalorder %s67, %s69
      %p73 = scmp.eq.s32.totalorder %s12, 0
      %p74 = por %p72, %p73
      %p75 = scmp.ne.s32.totalorder %s67, %s69
      %p76 = scmp.eq.s32.totalorder %s17, 3
      %p77 = por %p75, %p76
      %p78 = scmp.ne.s32.totalorder %s69, %s70
      %p79 = scmp.eq.s32.totalorder %s17, 0
      %p80 = por %p78, %p79
      %p81 = scmp.ne.s32.totalorder %s69, %s70
      %p82 = scmp.eq.s32.totalorder %s18, 3
      %p83 = por %p81, %p82
      %p85 = scmp.ne.s32.totalorder %s70, %s84
      %p86 = scmp.eq.s32.totalorder %s18, 0
      %p87 = por %p85, %p86
      %s88 = ssub.s32 %s12, %s19
      %p89 = scmp.eq.s32.totalorder %s88, 0
      %s91 = sadd.s32 %s90, 1
      %s92 = scalar_select %p89, %s90, %s91
      %p95 = pneg %p89
      %p96 = scmp.eq.s32.totalorder %s12, 3
      %p97 = por %p95, %p96
      %p98 = scmp.ne.s32.totalorder %s90, %s93
      %p99 = scmp.eq.s32.totalorder %s12, 0
      %p100 = por %p98, %p99
      %p101 = scmp.ne.s32.totalorder %s90, %s93
      %p102 = scmp.eq.s32.totalorder %s17, 3
      %p103 = por %p101, %p102
      %p104 = scmp.ne.s32.totalorder %s93, %s94
      %p105 = scmp.eq.s32.totalorder %s17, 0
      %p106 = por %p104, %p105
      %p107 = scmp.ne.s32.totalorder %s93, %s94
      %p108 = scmp.eq.s32.totalorder %s18, 3
      %p109 = por %p107, %p108
      %p111 = scmp.ne.s32.totalorder %s94, %s110
      %p112 = scmp.eq.s32.totalorder %s18, 0
      %p113 = por %p111, %p112
      %p114 = scmp.le.s32.totalorder 1, %s12
      %p115 = scmp.lt.s32.totalorder %s12, 5
      %p116 = pnand %p114, %p115
      %p117 = pneg %p116
      // Predicated region
      $region9: #{tpu_custom_call.1} parent=5 // pred_check
        _
      $region10: #{tpu_custom_call.1} parent=5 // pred_check_branch
        %119 = sbr.rel (%p116) target = $region12
      $region11: #{tpu_custom_call.1} parent=5 // pred_region
        %s120 = ssub.s32 %s12, 1
        // Predicated region
        $region13: #{tpu_custom_call.1} parent=11 // pred_check
          %p121 = pneg %p59
        $region14: #{tpu_custom_call.1} parent=11 // pred_check_branch
          %123 = sbr.rel (%p121) target = $region16
        $region15: #{tpu_custom_call.1} parent=11 // pred_region
          _
        $region16: #{tpu_custom_call.1} parent=11 // pred_fallthru
          _
        // Predicated region
        $region17: #{tpu_custom_call.1} parent=11 // pred_check
          %p124 = pneg %p80
        $region18: #{tpu_custom_call.1} parent=11 // pred_check_branch
          %126 = sbr.rel (%p124) target = $region20
        $region19: #{tpu_custom_call.1} parent=11 // pred_region
          _
        $region20: #{tpu_custom_call.1} parent=11 // pred_fallthru
          _
      $region12: #{tpu_custom_call.1} parent=5 // pred_fallthru
        _
      %p127 = scmp.lt.s32.totalorder %s12, 4
      // Predicated region
      $region21: #{tpu_custom_call.1} parent=5 // pred_check
        %p128 = pneg %p127
      $region22: #{tpu_custom_call.1} parent=5 // pred_check_branch
        %130 = sbr.rel (%p128) target = $region24
      $region23: #{tpu_custom_call.1} parent=5 // pred_region
        // Predicated region
        $region25: #{tpu_custom_call.1} parent=23 // pred_check
          %p131 = pneg %p32
        $region26: #{tpu_custom_call.1} parent=23 // pred_check_branch
          %133 = sbr.rel (%p131) target = $region28
        $region27: #{tpu_custom_call.1} parent=23 // pred_region
          %s134 = smul.u32 4, %s12
          %p135 = scmp.lt.s32.totalorder %s134, 15
          %s136 = scalar_select %p135, %s134, 15
          %s137 = smul.addr %s136, 8
          %s138 = scalar_lea.vmem %s0, %s137
          %s139 = smul.u32 4, %s12
        $region28: #{tpu_custom_call.1} parent=23 // pred_fallthru
          _
      $region24: #{tpu_custom_call.1} parent=5 // pred_fallthru
        _
      %p140 = scmp.le.s32.totalorder 1, %s12
      %p141 = scmp.lt.s32.totalorder %s12, 5
      %p142 = pnand %p140, %p141
      %p143 = pneg %p142
      // Predicated region
      $region29: #{tpu_custom_call.1} parent=5 // pred_check
        _
      $region30: #{tpu_custom_call.1} parent=5 // pred_check_branch
        %145 = sbr.rel (%p142) target = $region32
      $region31: #{tpu_custom_call.1} parent=5 // pred_region
        %s146 = ssub.s32 %s12, 1
        %s147 = smul.u32 4, %s17
        %p148 = scmp.lt.s32.totalorder %s147, 15
        %s149 = scalar_select %p148, %s147, 15
        %s150 = smul.addr %s149, 8
        %s151 = scalar_lea.vmem %s0, %s150
        %p152 = pneg %p38
        %p153 = pneg %p35
        %p154 = pneg %p59
        %p155 = pneg %p56
        %p156 = pneg %p80
        %p157 = pneg %p77
        %p158 = pneg %p106
        %p159 = pneg %p103
        %s160 = sand.u32 %s93, 1
        %s161 = scalar_lea.sflag [#allocation3], %s160
        %s162 = sand.u32 %s93, 1
        %s163 = smul.addr %s162, 64
        %s164 = scalar_lea.vmem [#allocation2], %s163
        %s165 = smul.u32 4, %s17
        %p166 = scmp.lt.s32.totalorder %s165, 15
        %s167 = scalar_select %p166, %s165, 15
        %s168 = smul.addr %s167, 8
        %s169 = scalar_lea.vmem %s0, %s168
        %s170 = smul.u32 4, %s17
        %s171 = smul.u32 4, %s17
        %v172 = vld [vmem:[%s169] sm:$0xff]
        %v173 = vld [vmem:[%s169 + $0x8] sm:$0xff]
        %v174 = vld [vmem:[%s169 + $0x10] sm:$0xff]
        %v175 = vld [vmem:[%s169 + $0x18] sm:$0xff]
        %v176 = vld [vmem:[%s1] sm:$0xff]
        %v177 = vld [vmem:[%s1 + $0x8] sm:$0xff]
        %v178 = vld [vmem:[%s2] sm:$0x3]
        %v180 = vlaneseq
        %v181 = vshrl.u32 %v180, 7
        %v182 = vsub.s32 0, %v181
        %v183 = vrot.slane %v178, %v182
        %v184 = vlaneseq
        %v185 = vshrl.u32 %v184, 7
        %v186 = vsub.s32 1, %v185
        %v187 = vrot.slane %v178, %v186
        %vm190 = vcmask 64512
        %v192 = vsel %vm190, %v172, 0
        %v195 = vsel %vm190, %v173, 0
        %v198 = vsel %vm190, %v174, 0
        %v201 = vsel %vm190, %v175, 0
        %203 = vmatprep.subr.mxu0 0.0
        %204 = vmatpush1.msra.mxu0 0.0
        %205 = vmatprep.subr.mxu0 0.0
        %206 = vmatpush1.msra.mxu0 0.0
        %207 = vmatprep.subr.mxu0 0.0
        %208 = vmatpush1.msra.mxu0 0.0
        %209 = vmatprep.subr.mxu0 0.0
        %210 = vmatpush1.msra.mxu0 0.0
        %211 = vmatprep.subr.mxu0 0.0
        %212 = vmatpush1.msra.mxu0 0.0
        %213 = vmatprep.subr.mxu0 0.0
        %214 = vmatpush1.msra.mxu0 0.0
        %215 = vmatprep.subr.mxu0 0.0
        %216 = vmatpush1.msra.mxu0 0.0
        %217 = vmatprep.subr.mxu0 0.0
        %218 = vmatpush1.msra.mxu0 0.0
        %219 = vmatprep.subr.mxu0 0.0
        %220 = vmatpush1.msra.mxu0 0.0
        %221 = vmatprep.subr.mxu0 0.0
        %222 = vmatpush1.msra.mxu0 0.0
        %223 = vmatprep.subr.mxu0 0.0
        %224 = vmatpush1.msra.mxu0 0.0
        %225 = vmatprep.subr.mxu0 0.0
        %226 = vmatpush1.msra.mxu0 0.0
        %227 = vmatprep.subr.mxu0 0.0
        %228 = vmatpush1.msra.mxu0 0.0
        %229 = vmatprep.subr.mxu0 0.0
        %230 = vmatpush1.msra.mxu0 0.0
        %231 = vmatprep.subr.mxu0 0.0
        %232 = vmatpush1.msra.mxu0 0.0
        %v233 = vand.u32 %v177, 4294901760
        %234 = vmatprep.subr.mxu0 %v233
        %v235 = vand.u32 %v176, 4294901760
        %236 = vmatpush1.msra.mxu0 %v235
        %237 = vmatprep.subr.mxu0 0.0
        %238 = vmatpush2.msra.mxu0 0.0
        %239 = vmatprep.subr.mxu0 0.0
        %240 = vmatpush2.msra.mxu0 0.0
        %241 = vmatprep.subr.mxu0 0.0
        %242 = vmatpush2.msra.mxu0 0.0
        %243 = vmatprep.subr.mxu0 0.0
        %244 = vmatpush2.msra.mxu0 0.0
        %245 = vmatprep.subr.mxu0 0.0
        %246 = vmatpush2.msra.mxu0 0.0
        %247 = vmatprep.subr.mxu0 0.0
        %248 = vmatpush2.msra.mxu0 0.0
        %249 = vmatprep.subr.mxu0 0.0
        %250 = vmatpush2.msra.mxu0 0.0
        %251 = vmatprep.subr.mxu0 0.0
        %252 = vmatpush2.msra.mxu0 0.0
        %253 = vmatprep.subr.mxu0 0.0
        %254 = vmatpush2.msra.mxu0 0.0
        %255 = vmatprep.subr.mxu0 0.0
        %256 = vmatpush2.msra.mxu0 0.0
        %257 = vmatprep.subr.mxu0 0.0
        %258 = vmatpush2.msra.mxu0 0.0
        %259 = vmatprep.subr.mxu0 0.0
        %260 = vmatpush2.msra.mxu0 0.0
        %261 = vmatprep.subr.mxu0 0.0
        %262 = vmatpush2.msra.mxu0 0.0
        %263 = vmatprep.subr.mxu0 0.0
        %264 = vmatpush2.msra.mxu0 0.0
        %265 = vmatprep.subr.mxu0 0.0
        %266 = vmatpush2.msra.mxu0 0.0
        %267 = vmatprep.subr.mxu0 0.0
        %268 = vmatpush2.msra.mxu0 0.0
        %269 = vmatprep.mubr.f32.mxu0 0.0
        %v270 = vand.u32 %v192, 4294901760
        %v271 = vsub.f32 %v192, %v270
        %v272 = vand.u32 %v271, 4294901760
        %v273 = vsub.f32 %v271, %v272
        %v274 = vand.u32 %v273, 4294901760
        %275 = vmatmul.mubr.f32.gmra.mxu0 %v274
        %v276 = vpop.f32.mrf.mxu0
        %v277 = vadd.f32 %v183, %v276
        %v278 = vpop.f32.mrf.mxu0
        %v279 = vadd.f32 %v187, %v278
        %280 = vmatprep.mubr.f32.mxu0 0.0
        %v281 = vand.u32 %v195, 4294901760
        %v282 = vsub.f32 %v195, %v281
        %v283 = vand.u32 %v282, 4294901760
        %v284 = vsub.f32 %v282, %v283
        %v285 = vand.u32 %v284, 4294901760
        %286 = vmatmul.mubr.f32.gmra.mxu0 %v285
        %v287 = vpop.f32.mrf.mxu0
        %v288 = vadd.f32 %v183, %v287
        %v289 = vpop.f32.mrf.mxu0
        %v290 = vadd.f32 %v187, %v289
        %291 = vmatprep.mubr.f32.mxu0 0.0
        %v292 = vand.u32 %v198, 4294901760
        %v293 = vsub.f32 %v198, %v292
        %v294 = vand.u32 %v293, 4294901760
        %v295 = vsub.f32 %v293, %v294
        %v296 = vand.u32 %v295, 4294901760
        %297 = vmatmul.mubr.f32.gmra.mxu0 %v296
        %v298 = vpop.f32.mrf.mxu0
        %v299 = vadd.f32 %v183, %v298
        %v300 = vpop.f32.mrf.mxu0
        %v301 = vadd.f32 %v187, %v300
        %302 = vmatprep.mubr.f32.mxu0 0.0
        %v303 = vand.u32 %v201, 4294901760
        %v304 = vsub.f32 %v201, %v303
        %v305 = vand.u32 %v304, 4294901760
        %v306 = vsub.f32 %v304, %v305
        %v307 = vand.u32 %v306, 4294901760
        %308 = vmatmul.mubr.f32.gmra.mxu0 %v307
        %v309 = vpop.f32.mrf.mxu0
        %v310 = vadd.f32 %v183, %v309
        %v311 = vpop.f32.mrf.mxu0
        %v312 = vadd.f32 %v187, %v311
        %313 = vdwg.mxu0
        %314 = vmatprep.subr.mxu0 0.0
        %315 = vmatpush1.msra.mxu0 0.0
        %316 = vmatprep.subr.mxu0 0.0
        %317 = vmatpush1.msra.mxu0 0.0
        %318 = vmatprep.subr.mxu0 0.0
        %319 = vmatpush1.msra.mxu0 0.0
        %320 = vmatprep.subr.mxu0 0.0
        %321 = vmatpush1.msra.mxu0 0.0
        %322 = vmatprep.subr.mxu0 0.0
        %323 = vmatpush1.msra.mxu0 0.0
        %324 = vmatprep.subr.mxu0 0.0
        %325 = vmatpush1.msra.mxu0 0.0
        %326 = vmatprep.subr.mxu0 0.0
        %327 = vmatpush1.msra.mxu0 0.0
        %328 = vmatprep.subr.mxu0 0.0
        %329 = vmatpush1.msra.mxu0 0.0
        %330 = vmatprep.subr.mxu0 0.0
        %331 = vmatpush1.msra.mxu0 0.0
        %332 = vmatprep.subr.mxu0 0.0
        %333 = vmatpush1.msra.mxu0 0.0
        %334 = vmatprep.subr.mxu0 0.0
        %335 = vmatpush1.msra.mxu0 0.0
        %336 = vmatprep.subr.mxu0 0.0
        %337 = vmatpush1.msra.mxu0 0.0
        %338 = vmatprep.subr.mxu0 0.0
        %339 = vmatpush1.msra.mxu0 0.0
        %340 = vmatprep.subr.mxu0 0.0
        %341 = vmatpush1.msra.mxu0 0.0
        %342 = vmatprep.subr.mxu0 0.0
        %343 = vmatpush1.msra.mxu0 0.0
        %v344 = vand.u32 %v177, 4294901760
        %v345 = vsub.f32 %v177, %v344
        %v346 = vand.u32 %v345, 4294901760
        %v347 = vsub.f32 %v345, %v346
        %v348 = vand.u32 %v347, 4294901760
        %349 = vmatprep.subr.mxu0 %v348
        %v350 = vand.u32 %v176, 4294901760
        %v351 = vsub.f32 %v176, %v350
        %v352 = vand.u32 %v351, 4294901760
        %v353 = vsub.f32 %v351, %v352
        %v354 = vand.u32 %v353, 4294901760
        %355 = vmatpush1.msra.mxu0 %v354
        %356 = vmatprep.subr.mxu0 0.0
        %357 = vmatpush2.msra.mxu0 0.0
        %358 = vmatprep.subr.mxu0 0.0
        %359 = vmatpush2.msra.mxu0 0.0
        %360 = vmatprep.subr.mxu0 0.0
        %361 = vmatpush2.msra.mxu0 0.0
        %362 = vmatprep.subr.mxu0 0.0
        %363 = vmatpush2.msra.mxu0 0.0
        %364 = vmatprep.subr.mxu0 0.0
        %365 = vmatpush2.msra.mxu0 0.0
        %366 = vmatprep.subr.mxu0 0.0
        %367 = vmatpush2.msra.mxu0 0.0
        %368 = vmatprep.subr.mxu0 0.0
        %369 = vmatpush2.msra.mxu0 0.0
        %370 = vmatprep.subr.mxu0 0.0
        %371 = vmatpush2.msra.mxu0 0.0
        %372 = vmatprep.subr.mxu0 0.0
        %373 = vmatpush2.msra.mxu0 0.0
        %374 = vmatprep.subr.mxu0 0.0
        %375 = vmatpush2.msra.mxu0 0.0
        %376 = vmatprep.subr.mxu0 0.0
        %377 = vmatpush2.msra.mxu0 0.0
        %378 = vmatprep.subr.mxu0 0.0
        %379 = vmatpush2.msra.mxu0 0.0
        %380 = vmatprep.subr.mxu0 0.0
        %381 = vmatpush2.msra.mxu0 0.0
        %382 = vmatprep.subr.mxu0 0.0
        %383 = vmatpush2.msra.mxu0 0.0
        %384 = vmatprep.subr.mxu0 0.0
        %385 = vmatpush2.msra.mxu0 0.0
        %386 = vmatprep.subr.mxu0 0.0
        %387 = vmatpush2.msra.mxu0 0.0
        %388 = vmatprep.mubr.f32.mxu0 0.0
        %v389 = vand.u32 %v192, 4294901760
        %390 = vmatmul.mubr.f32.gmra.mxu0 %v389
        %v391 = vpop.f32.mrf.mxu0
        %v392 = vadd.f32 %v277, %v391
        %v393 = vpop.f32.mrf.mxu0
        %v394 = vadd.f32 %v279, %v393
        %395 = vmatprep.mubr.f32.mxu0 0.0
        %v396 = vand.u32 %v195, 4294901760
        %397 = vmatmul.mubr.f32.gmra.mxu0 %v396
        %v398 = vpop.f32.mrf.mxu0
        %v399 = vadd.f32 %v288, %v398
        %v400 = vpop.f32.mrf.mxu0
        %v401 = vadd.f32 %v290, %v400
        %402 = vmatprep.mubr.f32.mxu0 0.0
        %v403 = vand.u32 %v198, 4294901760
        %404 = vmatmul.mubr.f32.gmra.mxu0 %v403
        %v405 = vpop.f32.mrf.mxu0
        %v406 = vadd.f32 %v299, %v405
        %v407 = vpop.f32.mrf.mxu0
        %v408 = vadd.f32 %v301, %v407
        %409 = vmatprep.mubr.f32.mxu0 0.0
        %v410 = vand.u32 %v201, 4294901760
        %411 = vmatmul.mubr.f32.gmra.mxu0 %v410
        %v412 = vpop.f32.mrf.mxu0
        %v413 = vadd.f32 %v310, %v412
        %v414 = vpop.f32.mrf.mxu0
        %v415 = vadd.f32 %v312, %v414
        %416 = vdwg.mxu0
        %417 = vmatprep.subr.mxu0 0.0
        %418 = vmatpush1.msra.mxu0 0.0
        %419 = vmatprep.subr.mxu0 0.0
        %420 = vmatpush1.msra.mxu0 0.0
        %421 = vmatprep.subr.mxu0 0.0
        %422 = vmatpush1.msra.mxu0 0.0
        %423 = vmatprep.subr.mxu0 0.0
        %424 = vmatpush1.msra.mxu0 0.0
        %425 = vmatprep.subr.mxu0 0.0
        %426 = vmatpush1.msra.mxu0 0.0
        %427 = vmatprep.subr.mxu0 0.0
        %428 = vmatpush1.msra.mxu0 0.0
        %429 = vmatprep.subr.mxu0 0.0
        %430 = vmatpush1.msra.mxu0 0.0
        %431 = vmatprep.subr.mxu0 0.0
        %432 = vmatpush1.msra.mxu0 0.0
        %433 = vmatprep.subr.mxu0 0.0
        %434 = vmatpush1.msra.mxu0 0.0
        %435 = vmatprep.subr.mxu0 0.0
        %436 = vmatpush1.msra.mxu0 0.0
        %437 = vmatprep.subr.mxu0 0.0
        %438 = vmatpush1.msra.mxu0 0.0
        %439 = vmatprep.subr.mxu0 0.0
        %440 = vmatpush1.msra.mxu0 0.0
        %441 = vmatprep.subr.mxu0 0.0
        %442 = vmatpush1.msra.mxu0 0.0
        %443 = vmatprep.subr.mxu0 0.0
        %444 = vmatpush1.msra.mxu0 0.0
        %445 = vmatprep.subr.mxu0 0.0
        %446 = vmatpush1.msra.mxu0 0.0
        %v447 = vand.u32 %v177, 4294901760
        %v448 = vsub.f32 %v177, %v447
        %449 = vmatprep.subr.mxu0 %v448
        %v450 = vand.u32 %v176, 4294901760
        %v451 = vsub.f32 %v176, %v450
        %452 = vmatpush1.msra.mxu0 %v451
        %453 = vmatprep.subr.mxu0 0.0
        %454 = vmatpush2.msra.mxu0 0.0
        %455 = vmatprep.subr.mxu0 0.0
        %456 = vmatpush2.msra.mxu0 0.0
        %457 = vmatprep.subr.mxu0 0.0
        %458 = vmatpush2.msra.mxu0 0.0
        %459 = vmatprep.subr.mxu0 0.0
        %460 = vmatpush2.msra.mxu0 0.0
        %461 = vmatprep.subr.mxu0 0.0
        %462 = vmatpush2.msra.mxu0 0.0
        %463 = vmatprep.subr.mxu0 0.0
        %464 = vmatpush2.msra.mxu0 0.0
        %465 = vmatprep.subr.mxu0 0.0
        %466 = vmatpush2.msra.mxu0 0.0
        %467 = vmatprep.subr.mxu0 0.0
        %468 = vmatpush2.msra.mxu0 0.0
        %469 = vmatprep.subr.mxu0 0.0
        %470 = vmatpush2.msra.mxu0 0.0
        %471 = vmatprep.subr.mxu0 0.0
        %472 = vmatpush2.msra.mxu0 0.0
        %473 = vmatprep.subr.mxu0 0.0
        %474 = vmatpush2.msra.mxu0 0.0
        %475 = vmatprep.subr.mxu0 0.0
        %476 = vmatpush2.msra.mxu0 0.0
        %477 = vmatprep.subr.mxu0 0.0
        %478 = vmatpush2.msra.mxu0 0.0
        %479 = vmatprep.subr.mxu0 0.0
        %480 = vmatpush2.msra.mxu0 0.0
        %481 = vmatprep.subr.mxu0 0.0
        %482 = vmatpush2.msra.mxu0 0.0
        %483 = vmatprep.subr.mxu0 0.0
        %484 = vmatpush2.msra.mxu0 0.0
        %485 = vmatprep.mubr.f32.mxu0 0.0
        %v486 = vand.u32 %v192, 4294901760
        %v487 = vsub.f32 %v192, %v486
        %488 = vmatmul.mubr.f32.gmra.mxu0 %v487
        %v489 = vpop.f32.mrf.mxu0
        %v490 = vadd.f32 %v392, %v489
        %v491 = vpop.f32.mrf.mxu0
        %v492 = vadd.f32 %v394, %v491
        %493 = vmatprep.mubr.f32.mxu0 0.0
        %v494 = vand.u32 %v195, 4294901760
        %v495 = vsub.f32 %v195, %v494
        %496 = vmatmul.mubr.f32.gmra.mxu0 %v495
        %v497 = vpop.f32.mrf.mxu0
        %v498 = vadd.f32 %v399, %v497
        %v499 = vpop.f32.mrf.mxu0
        %v500 = vadd.f32 %v401, %v499
        %501 = vmatprep.mubr.f32.mxu0 0.0
        %v502 = vand.u32 %v198, 4294901760
        %v503 = vsub.f32 %v198, %v502
        %504 = vmatmul.mubr.f32.gmra.mxu0 %v503
        %v505 = vpop.f32.mrf.mxu0
        %v506 = vadd.f32 %v406, %v505
        %v507 = vpop.f32.mrf.mxu0
        %v508 = vadd.f32 %v408, %v507
        %509 = vmatprep.mubr.f32.mxu0 0.0
        %v510 = vand.u32 %v201, 4294901760
        %v511 = vsub.f32 %v201, %v510
        %512 = vmatmul.mubr.f32.gmra.mxu0 %v511
        %v513 = vpop.f32.mrf.mxu0
        %v514 = vadd.f32 %v413, %v513
        %v515 = vpop.f32.mrf.mxu0
        %v516 = vadd.f32 %v415, %v515
        %517 = vdwg.mxu0
        %518 = vmatprep.subr.mxu0 0.0
        %519 = vmatpush1.msra.mxu0 0.0
        %520 = vmatprep.subr.mxu0 0.0
        %521 = vmatpush1.msra.mxu0 0.0
        %522 = vmatprep.subr.mxu0 0.0
        %523 = vmatpush1.msra.mxu0 0.0
        %524 = vmatprep.subr.mxu0 0.0
        %525 = vmatpush1.msra.mxu0 0.0
        %526 = vmatprep.subr.mxu0 0.0
        %527 = vmatpush1.msra.mxu0 0.0
        %528 = vmatprep.subr.mxu0 0.0
        %529 = vmatpush1.msra.mxu0 0.0
        %530 = vmatprep.subr.mxu0 0.0
        %531 = vmatpush1.msra.mxu0 0.0
        %532 = vmatprep.subr.mxu0 0.0
        %533 = vmatpush1.msra.mxu0 0.0
        %534 = vmatprep.subr.mxu0 0.0
        %535 = vmatpush1.msra.mxu0 0.0
        %536 = vmatprep.subr.mxu0 0.0
        %537 = vmatpush1.msra.mxu0 0.0
        %538 = vmatprep.subr.mxu0 0.0
        %539 = vmatpush1.msra.mxu0 0.0
        %540 = vmatprep.subr.mxu0 0.0
        %541 = vmatpush1.msra.mxu0 0.0
        %542 = vmatprep.subr.mxu0 0.0
        %543 = vmatpush1.msra.mxu0 0.0
        %544 = vmatprep.subr.mxu0 0.0
        %545 = vmatpush1.msra.mxu0 0.0
        %546 = vmatprep.subr.mxu0 0.0
        %547 = vmatpush1.msra.mxu0 0.0
        %v548 = vand.u32 %v177, 4294901760
        %549 = vmatprep.subr.mxu0 %v548
        %v550 = vand.u32 %v176, 4294901760
        %551 = vmatpush1.msra.mxu0 %v550
        %552 = vmatprep.subr.mxu0 0.0
        %553 = vmatpush2.msra.mxu0 0.0
        %554 = vmatprep.subr.mxu0 0.0
        %555 = vmatpush2.msra.mxu0 0.0
        %556 = vmatprep.subr.mxu0 0.0
        %557 = vmatpush2.msra.mxu0 0.0
        %558 = vmatprep.subr.mxu0 0.0
        %559 = vmatpush2.msra.mxu0 0.0
        %560 = vmatprep.subr.mxu0 0.0
        %561 = vmatpush2.msra.mxu0 0.0
        %562 = vmatprep.subr.mxu0 0.0
        %563 = vmatpush2.msra.mxu0 0.0
        %564 = vmatprep.subr.mxu0 0.0
        %565 = vmatpush2.msra.mxu0 0.0
        %566 = vmatprep.subr.mxu0 0.0
        %567 = vmatpush2.msra.mxu0 0.0
        %568 = vmatprep.subr.mxu0 0.0
        %569 = vmatpush2.msra.mxu0 0.0
        %570 = vmatprep.subr.mxu0 0.0
        %571 = vmatpush2.msra.mxu0 0.0
        %572 = vmatprep.subr.mxu0 0.0
        %573 = vmatpush2.msra.mxu0 0.0
        %574 = vmatprep.subr.mxu0 0.0
        %575 = vmatpush2.msra.mxu0 0.0
        %576 = vmatprep.subr.mxu0 0.0
        %577 = vmatpush2.msra.mxu0 0.0
        %578 = vmatprep.subr.mxu0 0.0
        %579 = vmatpush2.msra.mxu0 0.0
        %580 = vmatprep.subr.mxu0 0.0
        %581 = vmatpush2.msra.mxu0 0.0
        %582 = vmatprep.subr.mxu0 0.0
        %583 = vmatpush2.msra.mxu0 0.0
        %584 = vmatprep.mubr.f32.mxu0 0.0
        %v585 = vand.u32 %v192, 4294901760
        %v586 = vsub.f32 %v192, %v585
        %v587 = vand.u32 %v586, 4294901760
        %588 = vmatmul.mubr.f32.gmra.mxu0 %v587
        %v589 = vpop.f32.mrf.mxu0
        %v590 = vadd.f32 %v490, %v589
        %v591 = vpop.f32.mrf.mxu0
        %v592 = vadd.f32 %v492, %v591
        %593 = vmatprep.mubr.f32.mxu0 0.0
        %v594 = vand.u32 %v195, 4294901760
        %v595 = vsub.f32 %v195, %v594
        %v596 = vand.u32 %v595, 4294901760
        %597 = vmatmul.mubr.f32.gmra.mxu0 %v596
        %v598 = vpop.f32.mrf.mxu0
        %v599 = vadd.f32 %v498, %v598
        %v600 = vpop.f32.mrf.mxu0
        %v601 = vadd.f32 %v500, %v600
        %602 = vmatprep.mubr.f32.mxu0 0.0
        %v603 = vand.u32 %v198, 4294901760
        %v604 = vsub.f32 %v198, %v603
        %v605 = vand.u32 %v604, 4294901760
        %606 = vmatmul.mubr.f32.gmra.mxu0 %v605
        %v607 = vpop.f32.mrf.mxu0
        %v608 = vadd.f32 %v506, %v607
        %v609 = vpop.f32.mrf.mxu0
        %v610 = vadd.f32 %v508, %v609
        %611 = vmatprep.mubr.f32.mxu0 0.0
        %v612 = vand.u32 %v201, 4294901760
        %v613 = vsub.f32 %v201, %v612
        %v614 = vand.u32 %v613, 4294901760
        %615 = vmatmul.mubr.f32.gmra.mxu0 %v614
        %v616 = vpop.f32.mrf.mxu0
        %v617 = vadd.f32 %v514, %v616
        %v618 = vpop.f32.mrf.mxu0
        %v619 = vadd.f32 %v516, %v618
        %620 = vdwg.mxu0
        %621 = vmatprep.subr.mxu0 0.0
        %622 = vmatpush1.msra.mxu0 0.0
        %623 = vmatprep.subr.mxu0 0.0
        %624 = vmatpush1.msra.mxu0 0.0
        %625 = vmatprep.subr.mxu0 0.0
        %626 = vmatpush1.msra.mxu0 0.0
        %627 = vmatprep.subr.mxu0 0.0
        %628 = vmatpush1.msra.mxu0 0.0
        %629 = vmatprep.subr.mxu0 0.0
        %630 = vmatpush1.msra.mxu0 0.0
        %631 = vmatprep.subr.mxu0 0.0
        %632 = vmatpush1.msra.mxu0 0.0
        %633 = vmatprep.subr.mxu0 0.0
        %634 = vmatpush1.msra.mxu0 0.0
        %635 = vmatprep.subr.mxu0 0.0
        %636 = vmatpush1.msra.mxu0 0.0
        %637 = vmatprep.subr.mxu0 0.0
        %638 = vmatpush1.msra.mxu0 0.0
        %639 = vmatprep.subr.mxu0 0.0
        %640 = vmatpush1.msra.mxu0 0.0
        %641 = vmatprep.subr.mxu0 0.0
        %642 = vmatpush1.msra.mxu0 0.0
        %643 = vmatprep.subr.mxu0 0.0
        %644 = vmatpush1.msra.mxu0 0.0
        %645 = vmatprep.subr.mxu0 0.0
        %646 = vmatpush1.msra.mxu0 0.0
        %647 = vmatprep.subr.mxu0 0.0
        %648 = vmatpush1.msra.mxu0 0.0
        %649 = vmatprep.subr.mxu0 0.0
        %650 = vmatpush1.msra.mxu0 0.0
        %v651 = vand.u32 %v177, 4294901760
        %v652 = vsub.f32 %v177, %v651
        %v653 = vand.u32 %v652, 4294901760
        %654 = vmatprep.subr.mxu0 %v653
        %v655 = vand.u32 %v176, 4294901760
        %v656 = vsub.f32 %v176, %v655
        %v657 = vand.u32 %v656, 4294901760
        %658 = vmatpush1.msra.mxu0 %v657
        %659 = vmatprep.subr.mxu0 0.0
        %660 = vmatpush2.msra.mxu0 0.0
        %661 = vmatprep.subr.mxu0 0.0
        %662 = vmatpush2.msra.mxu0 0.0
        %663 = vmatprep.subr.mxu0 0.0
        %664 = vmatpush2.msra.mxu0 0.0
        %665 = vmatprep.subr.mxu0 0.0
        %666 = vmatpush2.msra.mxu0 0.0
        %667 = vmatprep.subr.mxu0 0.0
        %668 = vmatpush2.msra.mxu0 0.0
        %669 = vmatprep.subr.mxu0 0.0
        %670 = vmatpush2.msra.mxu0 0.0
        %671 = vmatprep.subr.mxu0 0.0
        %672 = vmatpush2.msra.mxu0 0.0
        %673 = vmatprep.subr.mxu0 0.0
        %674 = vmatpush2.msra.mxu0 0.0
        %675 = vmatprep.subr.mxu0 0.0
        %676 = vmatpush2.msra.mxu0 0.0
        %677 = vmatprep.subr.mxu0 0.0
        %678 = vmatpush2.msra.mxu0 0.0
        %679 = vmatprep.subr.mxu0 0.0
        %680 = vmatpush2.msra.mxu0 0.0
        %681 = vmatprep.subr.mxu0 0.0
        %682 = vmatpush2.msra.mxu0 0.0
        %683 = vmatprep.subr.mxu0 0.0
        %684 = vmatpush2.msra.mxu0 0.0
        %685 = vmatprep.subr.mxu0 0.0
        %686 = vmatpush2.msra.mxu0 0.0
        %687 = vmatprep.subr.mxu0 0.0
        %688 = vmatpush2.msra.mxu0 0.0
        %689 = vmatprep.subr.mxu0 0.0
        %690 = vmatpush2.msra.mxu0 0.0
        %691 = vmatprep.mubr.f32.mxu0 0.0
        %v692 = vand.u32 %v192, 4294901760
        %693 = vmatmul.mubr.f32.gmra.mxu0 %v692
        %v694 = vpop.f32.mrf.mxu0
        %v695 = vadd.f32 %v590, %v694
        %v696 = vpop.f32.mrf.mxu0
        %v697 = vadd.f32 %v592, %v696
        %698 = vmatprep.mubr.f32.mxu0 0.0
        %v699 = vand.u32 %v195, 4294901760
        %700 = vmatmul.mubr.f32.gmra.mxu0 %v699
        %v701 = vpop.f32.mrf.mxu0
        %v702 = vadd.f32 %v599, %v701
        %v703 = vpop.f32.mrf.mxu0
        %v704 = vadd.f32 %v601, %v703
        %705 = vmatprep.mubr.f32.mxu0 0.0
        %v706 = vand.u32 %v198, 4294901760
        %707 = vmatmul.mubr.f32.gmra.mxu0 %v706
        %v708 = vpop.f32.mrf.mxu0
        %v709 = vadd.f32 %v608, %v708
        %v710 = vpop.f32.mrf.mxu0
        %v711 = vadd.f32 %v610, %v710
        %712 = vmatprep.mubr.f32.mxu0 0.0
        %v713 = vand.u32 %v201, 4294901760
        %714 = vmatmul.mubr.f32.gmra.mxu0 %v713
        %v715 = vpop.f32.mrf.mxu0
        %v716 = vadd.f32 %v617, %v715
        %v717 = vpop.f32.mrf.mxu0
        %v718 = vadd.f32 %v619, %v717
        %719 = vdwg.mxu0
        %720 = vmatprep.subr.mxu0 0.0
        %721 = vmatpush1.msra.mxu0 0.0
        %722 = vmatprep.subr.mxu0 0.0
        %723 = vmatpush1.msra.mxu0 0.0
        %724 = vmatprep.subr.mxu0 0.0
        %725 = vmatpush1.msra.mxu0 0.0
        %726 = vmatprep.subr.mxu0 0.0
        %727 = vmatpush1.msra.mxu0 0.0
        %728 = vmatprep.subr.mxu0 0.0
        %729 = vmatpush1.msra.mxu0 0.0
        %730 = vmatprep.subr.mxu0 0.0
        %731 = vmatpush1.msra.mxu0 0.0
        %732 = vmatprep.subr.mxu0 0.0
        %733 = vmatpush1.msra.mxu0 0.0
        %734 = vmatprep.subr.mxu0 0.0
        %735 = vmatpush1.msra.mxu0 0.0
        %736 = vmatprep.subr.mxu0 0.0
        %737 = vmatpush1.msra.mxu0 0.0
        %738 = vmatprep.subr.mxu0 0.0
        %739 = vmatpush1.msra.mxu0 0.0
        %740 = vmatprep.subr.mxu0 0.0
        %741 = vmatpush1.msra.mxu0 0.0
        %742 = vmatprep.subr.mxu0 0.0
        %743 = vmatpush1.msra.mxu0 0.0
        %744 = vmatprep.subr.mxu0 0.0
        %745 = vmatpush1.msra.mxu0 0.0
        %746 = vmatprep.subr.mxu0 0.0
        %747 = vmatpush1.msra.mxu0 0.0
        %748 = vmatprep.subr.mxu0 0.0
        %749 = vmatpush1.msra.mxu0 0.0
        %v750 = vand.u32 %v177, 4294901760
        %751 = vmatprep.subr.mxu0 %v750
        %v752 = vand.u32 %v176, 4294901760
        %753 = vmatpush1.msra.mxu0 %v752
        %754 = vmatprep.subr.mxu0 0.0
        %755 = vmatpush2.msra.mxu0 0.0
        %756 = vmatprep.subr.mxu0 0.0
        %757 = vmatpush2.msra.mxu0 0.0
        %758 = vmatprep.subr.mxu0 0.0
        %759 = vmatpush2.msra.mxu0 0.0
        %760 = vmatprep.subr.mxu0 0.0
        %761 = vmatpush2.msra.mxu0 0.0
        %762 = vmatprep.subr.mxu0 0.0
        %763 = vmatpush2.msra.mxu0 0.0
        %764 = vmatprep.subr.mxu0 0.0
        %765 = vmatpush2.msra.mxu0 0.0
        %766 = vmatprep.subr.mxu0 0.0
        %767 = vmatpush2.msra.mxu0 0.0
        %768 = vmatprep.subr.mxu0 0.0
        %769 = vmatpush2.msra.mxu0 0.0
        %770 = vmatprep.subr.mxu0 0.0
        %771 = vmatpush2.msra.mxu0 0.0
        %772 = vmatprep.subr.mxu0 0.0
        %773 = vmatpush2.msra.mxu0 0.0
        %774 = vmatprep.subr.mxu0 0.0
        %775 = vmatpush2.msra.mxu0 0.0
        %776 = vmatprep.subr.mxu0 0.0
        %777 = vmatpush2.msra.mxu0 0.0
        %778 = vmatprep.subr.mxu0 0.0
        %779 = vmatpush2.msra.mxu0 0.0
        %780 = vmatprep.subr.mxu0 0.0
        %781 = vmatpush2.msra.mxu0 0.0
        %782 = vmatprep.subr.mxu0 0.0
        %783 = vmatpush2.msra.mxu0 0.0
        %784 = vmatprep.subr.mxu0 0.0
        %785 = vmatpush2.msra.mxu0 0.0
        %786 = vmatprep.mubr.f32.mxu0 0.0
        %v787 = vand.u32 %v192, 4294901760
        %788 = vmatmul.mubr.f32.gmra.mxu0 %v787
        %v789 = vpop.f32.mrf.mxu0
        %v790 = vadd.f32 %v695, %v789
        %v791 = vpop.f32.mrf.mxu0
        %v792 = vadd.f32 %v697, %v791
        %793 = vmatprep.mubr.f32.mxu0 0.0
        %v794 = vand.u32 %v195, 4294901760
        %795 = vmatmul.mubr.f32.gmra.mxu0 %v794
        %v796 = vpop.f32.mrf.mxu0
        %v797 = vadd.f32 %v702, %v796
        %v798 = vpop.f32.mrf.mxu0
        %v799 = vadd.f32 %v704, %v798
        %800 = vmatprep.mubr.f32.mxu0 0.0
        %v801 = vand.u32 %v198, 4294901760
        %802 = vmatmul.mubr.f32.gmra.mxu0 %v801
        %v803 = vpop.f32.mrf.mxu0
        %v804 = vadd.f32 %v709, %v803
        %v805 = vpop.f32.mrf.mxu0
        %v806 = vadd.f32 %v711, %v805
        %807 = vmatprep.mubr.f32.mxu0 0.0
        %v808 = vand.u32 %v201, 4294901760
        %809 = vmatmul.mubr.f32.gmra.mxu0 %v808
        %v810 = vpop.f32.mrf.mxu0
        %v811 = vadd.f32 %v716, %v810
        %v812 = vpop.f32.mrf.mxu0
        %v813 = vadd.f32 %v718, %v812
        %814 = vdwg.mxu0
        %v815 = vtanh.pop %v790
        %v816 = vtanh.pop %v792
        %v817 = vtanh.pop %v797
        %v818 = vtanh.pop %v799
        %v819 = vtanh.pop %v804
        %v820 = vtanh.pop %v806
        %v821 = vtanh.pop %v811
        %v822 = vtanh.pop %v813
        %823 = vst [vmem:[%s164] sm:$0xff] %v815
        %824 = vst [vmem:[%s164 + $0x8] sm:$0xff] %v816
        %825 = vst [vmem:[%s164 + $0x10] sm:$0xff] %v817
        %826 = vst [vmem:[%s164 + $0x18] sm:$0xff] %v818
        %827 = vst [vmem:[%s164 + $0x20] sm:$0xff] %v819
        %828 = vst [vmem:[%s164 + $0x28] sm:$0xff] %v820
        %829 = vst [vmem:[%s164 + $0x30] sm:$0xff] %v821
        %830 = vst [vmem:[%s164 + $0x38] sm:$0xff] %v822
        %s831 = sand.u32 %s93, 1
        %s832 = scalar_lea.sflag [#allocation3], %s831
        %s833 = sand.u32 %s93, 1
        %s834 = smul.addr %s833, 64
        %s835 = scalar_lea.vmem [#allocation2], %s834
        // Predicated region
        $region33: #{tpu_custom_call.1} parent=31 // pred_check
          %p836 = pneg %p103
        $region34: #{tpu_custom_call.1} parent=31 // pred_check_branch
          %838 = sbr.rel (%p836) target = $region36
        $region35: #{tpu_custom_call.1} parent=31 // pred_region
          %s839 = smul.u32 4, %s17
          %s841 = ssub.s32 1024, 1024
          %842 = vsyncadd %s832, %s841
          %s843 = smul.addr %s839, 2
          %s844 = smul.addr %s843, 128
          %s845 = scalar_lea.hbm %s3, %s844
          %s846 = sshll.u32 %s835, 4
          %s847 = int_to_ptr.vmem [resolvable:$true] %s846
          %852 = dma.vmem_to_hbm [thread:$0]  %s847, 1024, %s845, %s832, 256, 256, 16
        $region36: #{tpu_custom_call.1} parent=31 // pred_fallthru
          _
      $region32: #{tpu_custom_call.1} parent=5 // pred_fallthru
        _
      %p853 = scmp.le.s32.totalorder 2, %s12
      // Predicated region
      $region37: #{tpu_custom_call.1} parent=5 // pred_check
        %p854 = pneg %p853
      $region38: #{tpu_custom_call.1} parent=5 // pred_check_branch
        %856 = sbr.rel (%p854) target = $region40
      $region39: #{tpu_custom_call.1} parent=5 // pred_region
        %s857 = ssub.s32 %s12, 2
        // Predicated region
        $region41: #{tpu_custom_call.1} parent=39 // pred_check
          %p858 = pneg %p109
        $region42: #{tpu_custom_call.1} parent=39 // pred_check_branch
          %860 = sbr.rel (%p858) target = $region44
        $region43: #{tpu_custom_call.1} parent=39 // pred_region
          %s861 = sand.u32 %s94, 1
          %s862 = scalar_lea.sflag [#allocation3], %s861
          %s863 = sand.u32 %s94, 1
          %s864 = smul.addr %s863, 64
          %s865 = scalar_lea.vmem [#allocation2], %s864
          %866 = dma.done %s862, 1024
        $region44: #{tpu_custom_call.1} parent=39 // pred_fallthru
          _
      $region40: #{tpu_custom_call.1} parent=5 // pred_fallthru
        _
    $region6: #{tpu_custom_call.1} parent=1 // loop_footer
      %s16 = sadd.s32 1, %s12
    $region7: #{tpu_custom_call.1} parent=1 // loop_footer_branch
      %11 = sbr.rel target = $region3
    $region8: #{tpu_custom_call.1} parent=1 // loop_exit
      _
    %867 = vsyncpa [#allocation3], 1
    %s868 = scalar_lea.sflag [#allocation3], 1
    %869 = vsyncpa %s868, 1

</llo_original>
